<compile_context>
chip_gen: v6e
topology: v6e:2x2x1
jax: 0.10.0
libtpu: 0.0.40
codegen_flags: <defaults>
</compile_context>

<pallas_src>
import math

import jax
import jax.numpy as jnp
from jax import lax
from jax.experimental import pallas as pl
from jax.experimental.pallas import tpu as pltpu

D_MODEL = 1        # feature_size
NUM_LAYERS = 2     # num_layers
HIDDEN = 64        # hidden_size (fc output width)
FF = 2048          # nn.TransformerEncoderLayer default dim_feedforward
LN_EPS = 1e-5      # nn.LayerNorm default eps
MAX_LEN = 500

# per-layer scalar parameter packing (everything that is d_model==1 sized):
# 0:wq 1:wk 2:wv 3:bq 4:bk 5:bv 6:w_out 7:b_out 8:gamma1 9:beta1 10:gamma2 11:beta2 12:b2
N_SCAL = 16  # padded


# ---------------------------------------------------------------------------
# Pallas kernel
# ---------------------------------------------------------------------------
def transam_collapsed_kernel(scal_ref, fcw_ref, fcb_ref, out_ref):
    """Writes fc(beta2 of the last encoder layer) broadcast over (Bt, S*HIDDEN).

    scal_ref : SMEM (NUM_LAYERS, N_SCAL) scalar parameters (scalar prefetch).
    fcw_ref  : VMEM (1, S*HIDDEN)  fc.weight[:, 0] tiled S times (lane-dense).
    fcb_ref  : VMEM (1, S*HIDDEN)  fc.bias tiled S times (lane-dense).
    out_ref  : VMEM (Bt, S*HIDDEN) lane-dense output block.
    """
    bt, flat = out_ref.shape
    # Exact encoder output for d_model == 1: beta2 (ln2.bias) of the last layer.
    beta2_last = scal_ref[NUM_LAYERS - 1, 11]
    # fc: Linear(1, HIDDEN) on a constant -> one affine VPU pass over S*HIDDEN lanes.
    row = fcw_ref[...] * beta2_last + fcb_ref[...]          # (1, S*HIDDEN)
    # Sublane broadcast + single unmasked dense store (no per-s slices/concat).
    out_ref[...] = jnp.broadcast_to(row, (bt, flat))


def _pick_batch_tile(b_padded):
    """b_padded is a multiple of 8.  Fat tiles amortize per-step overhead, but
    keep >=2 grid steps when possible so the 'parallel' batch axis can shard
    across v7x's two TensorCores."""
    if b_padded <= 8:
        return b_padded
    half = (b_padded // 2) // 8 * 8
    if half >= 8 and b_padded % half == 0:
        return half
    return 8


@jax.jit
def transam_forward(src, pe_slice, scal, w1, b1, w2, fcw, fcb):
    """Forward pass of TransAm.  Interface keeps every parameter of the module;
    for feature_size == 1 only scal[-1, 11] (last layer ln2.bias) and fcw/fcb
    reach the kernel — everything else is provably dead w.r.t. the output."""
    assert D_MODEL == 1, "collapsed kernel is only valid for feature_size == 1"
    B, S, _ = src.shape
    del pe_slice, w1, b1, w2  # dead w.r.t. the module output (see header proof)

    b_padded = -(-B // 8) * 8          # pad batch to a sublane multiple (>= 8)
    bt = _pick_batch_tile(b_padded)

    # Layout plumbing only: present fc params as a lane-dense (1, S*HIDDEN) row
    # so the kernel's store is a single unmasked dense vst per step.
    fcw_tiled = jnp.tile(fcw.reshape(1, HIDDEN), (1, S))    # (1, S*HIDDEN)
    fcb_tiled = jnp.tile(fcb.reshape(1, HIDDEN), (1, S))    # (1, S*HIDDEN)

    grid_spec = pltpu.PrefetchScalarGridSpec(
        num_scalar_prefetch=1,                     # `scal` lands in SMEM
        grid=(b_padded // bt,),
        in_specs=[
            pl.BlockSpec((1, S * HIDDEN), lambda b, scal: (0, 0)),  # fcw row, resident
            pl.BlockSpec((1, S * HIDDEN), lambda b, scal: (0, 0)),  # fcb row, resident
        ],
        out_specs=pl.BlockSpec((bt, S * HIDDEN), lambda b, scal: (b, 0)),
    )
    # Live VMEM: 2 resident (1,S*HIDDEN) rows + double-buffered (bt,S*HIDDEN)
    # output  (< 2.5 MiB even at S = MAX_LEN) -> fits every generation's scoped
    # default; no vmem_limit_bytes override needed.
    out_flat = pl.pallas_call(
        transam_collapsed_kernel,
        out_shape=jax.ShapeDtypeStruct((b_padded, S * HIDDEN), jnp.float32),
        grid_spec=grid_spec,
        compiler_params=pltpu.CompilerParams(
            dimension_semantics=("parallel",),     # batch tiles independent (v7x: 2 TCs)
        ),
    )(scal, fcw_tiled, fcb_tiled)
    return out_flat[:B].reshape(B, S, HIDDEN)      # drop batch padding; layout only


# ---------------------------------------------------------------------------
# Faithful pure-JAX reference (full attention / FF / LayerNorm) for validation
# ---------------------------------------------------------------------------
def _layernorm_lastdim(x, gamma, beta):
    mu = jnp.mean(x, axis=-1, keepdims=True)
    var = jnp.mean(jnp.square(x - mu), axis=-1, keepdims=True)
    return (x - mu) * lax.rsqrt(var + LN_EPS) * gamma + beta


def make_positional_encoding(d_model=D_MODEL, max_len=MAX_LEN):
    # Faithful port of PositionalEncoding.__init__
    pe = jnp.zeros((max_len, d_model), dtype=jnp.float32)
    position = jnp.arange(max_len, dtype=jnp.float32)[:, None]
    div_term = jnp.exp(jnp.arange(0, d_model, 2, dtype=jnp.float32)
                       * (-math.log(10000.0) / d_model))
    pe = pe.at[:, 0::2].set(jnp.sin(position * div_term))
    if d_model > 1:
        ncos = pe[:, 1::2].shape[1]
        pe = pe.at[:, 1::2].set(jnp.cos(position * div_term[:ncos]))
    return pe[None].transpose(1, 0, 2)   # (max_len, 1, d_model)


def transam_reference(src, pe_slice, scal, w1, b1, w2, fcw, fcb):
    """Unabridged forward (PE quirk, unmasked attention, post-LN, FF, fc)."""
    x = src + pe_slice
    for l in range(NUM_LAYERS):
        wq, wk, wv = scal[l, 0], scal[l, 1], scal[l, 2]
        bq, bk, bv = scal[l, 3], scal[l, 4], scal[l, 5]
        wo, bo = scal[l, 6], scal[l, 7]
        g1, be1 = scal[l, 8], scal[l, 9]
        g2, be2 = scal[l, 10], scal[l, 11]
        b2 = scal[l, 12]
        q = x * wq + bq; k = x * wk + bk; v = x * wv + bv
        scores = jnp.einsum('bid,bjd->bij', q, k) / math.sqrt(D_MODEL)
        attn = jax.nn.softmax(scores, axis=-1)
        sa = jnp.einsum('bij,bjd->bid', attn, v) * wo + bo
        x = _layernorm_lastdim(x + sa, g1, be1)
        h = jnp.maximum(x * w1[l][None, None, :] + b1[l][None, None, :], 0.0)
        y = jnp.sum(h * w2[l][None, None, :], axis=-1, keepdims=True) + b2
        x = _layernorm_lastdim(x + y, g2, be2)
    return x * fcw[None] + fcb[None]


if __name__ == "__main__":
    B, S = 2, 8
    key = jax.random.PRNGKey(0)
    ks = jax.random.split(key, 8)

    # Deterministic synthetic parameters (shapes dictated by the module __init__).
    src = jax.random.normal(ks[0], (B, S, D_MODEL), jnp.float32)
    pe = make_positional_encoding()
    pe_slice = pe[:B]                                   # (B, 1, D_MODEL) — faithful (quirky) PE slice
    scal = jax.random.uniform(ks[1], (NUM_LAYERS, N_SCAL), jnp.float32, -0.3, 0.3)
    w1 = jax.random.uniform(ks[2], (NUM_LAYERS, FF), jnp.float32, -0.05, 0.05)   # linear1.weight[:, 0]
    b1 = jax.random.uniform(ks[3], (NUM_LAYERS, FF), jnp.float32, -0.05, 0.05)   # linear1.bias
    w2 = jax.random.uniform(ks[4], (NUM_LAYERS, FF), jnp.float32, -0.05, 0.05)   # linear2.weight[0, :]
    fcw = jax.random.uniform(ks[5], (1, HIDDEN), jnp.float32, -0.1, 0.1)         # fc.weight.T
    fcb = jax.random.uniform(ks[6], (1, HIDDEN), jnp.float32, -0.1, 0.1)         # fc.bias

    out = transam_forward(src, pe_slice, scal, w1, b1, w2, fcw, fcb)
    out = jax.block_until_ready(out)

    ref = transam_reference(src, pe_slice, scal, w1, b1, w2, fcw, fcb)
    assert out.shape == (B, S, HIDDEN), out.shape
    max_err = float(jnp.max(jnp.abs(out - ref)))
    assert jnp.allclose(out, ref, rtol=1e-5, atol=1e-6), f"max_err={max_err}"
    print("KERNEL_OK")
</pallas_src>

<mosaic_0001>
module attributes {stable_mosaic.version = 11 : i64} {
  func.func @transam_collapsed_kernel(%arg0: i32, %arg1: memref<2x16xf32, #tpu.memory_space<smem>>, %arg2: memref<1x512xf32, #tpu.memory_space<vmem>>, %arg3: memref<1x512xf32, #tpu.memory_space<vmem>>, %arg4: memref<8x512xf32, #tpu.memory_space<vmem>>) attributes {dimension_semantics = [#tpu.dimension_semantics<parallel>], iteration_bounds = array<i64: 1>, scalar_prefetch = 1 : i64, scratch_operands = 0 : i64, tpu.core_type = #tpu.core_type<tc>, window_params = [{pipeline_mode = #tpu.pipeline_mode<synchronous>, transform_indices = @transform_0, window_bounds = array<i64: 1, 512>}, {pipeline_mode = #tpu.pipeline_mode<synchronous>, transform_indices = @transform_1, window_bounds = array<i64: 1, 512>}, {transform_indices = @transform_2, window_bounds = array<i64: 8, 512>}]} {
    %c1 = arith.constant 1 : index
    %c11 = arith.constant 11 : index
    %0 = memref.load %arg1[%c1, %c11] : memref<2x16xf32, #tpu.memory_space<smem>>
    %c0 = arith.constant 0 : index
    %c0_0 = arith.constant 0 : index
    %1 = vector.load %arg2[%c0, %c0_0] : memref<1x512xf32, #tpu.memory_space<vmem>>, vector<1x512xf32>
    %2 = vector.broadcast %0 : f32 to vector<1x512xf32>
    %3 = arith.mulf %1, %2 : vector<1x512xf32>
    %c0_1 = arith.constant 0 : index
    %c0_2 = arith.constant 0 : index
    %4 = vector.load %arg3[%c0_1, %c0_2] : memref<1x512xf32, #tpu.memory_space<vmem>>, vector<1x512xf32>
    %5 = arith.addf %3, %4 : vector<1x512xf32>
    %6 = vector.shape_cast %5 : vector<1x512xf32> to vector<1x512xf32>
    %7 = vector.broadcast %6 : vector<1x512xf32> to vector<8x512xf32>
    %c0_3 = arith.constant 0 : index
    %c0_4 = arith.constant 0 : index
    %8 = vector.load %arg4[%c0_3, %c0_4] : memref<8x512xf32, #tpu.memory_space<vmem>>, vector<8x512xf32>
    tpu.vector_store %arg4[%c0_3, %c0_4], %7 {strides = array<i32>} : memref<8x512xf32, #tpu.memory_space<vmem>>, vector<8x512xf32>,
    return
  }
  func.func @transform_0(%arg0: i32, %arg1: memref<2x16xf32, #tpu.memory_space<smem>>) -> (i32, i32) {
    %c0_i32 = arith.constant 0 : i32
    %c0_i32_0 = arith.constant 0 : i32
    %c0_i32_1 = arith.constant 0 : i32
    return %c0_i32, %c0_i32_0 : i32, i32
  }
  func.func @transform_1(%arg0: i32, %arg1: memref<2x16xf32, #tpu.memory_space<smem>>) -> (i32, i32) {
    %c0_i32 = arith.constant 0 : i32
    %c0_i32_0 = arith.constant 0 : i32
    %c0_i32_1 = arith.constant 0 : i32
    return %c0_i32, %c0_i32_0 : i32, i32
  }
  func.func @transform_2(%arg0: i32, %arg1: memref<2x16xf32, #tpu.memory_space<smem>>) -> (i32, i32) {
    %c0_i32 = arith.constant 0 : i32
    %c0_i32_0 = arith.constant 0 : i32
    return %arg0, %c0_i32 : i32, i32
  }
}

</mosaic_0001>

<llo_original>
// kernel: transam_forward.1
$region0: #{transam_forward.1}
  #allocation0 [shape = 'u32[]', space=smem, size = 0x4, offset = 0x4, fixed_abs, tag = 'smem constant byte address 0x4 - core index']
  #allocation1 [shape = 'u32[144,128]{1,0:T(1,128)}', space=vmem, size = 0x12000, scoped, tag = 'internal scratch']
  #allocation2 [shape = 's32[1]{0}', space=sflag, size = 0x4, scoped, tag = 'scoped memory for transam_forward.1']
  #allocation3 [shape = 'u8[1024]{0}', space=smem, size = 0x400, scoped, tag = 'prefetched SMEM operand 0']
  %s0 = inlined_call_operand.vmem [shape: f32[2,16], index: 0, kind: input, shape index: {}]
  %s1 = inlined_call_operand.vmem [shape: f32[1,512], index: 1, kind: input, shape index: {}]
  %s2 = inlined_call_operand.vmem [shape: f32[1,512], index: 2, kind: input, shape index: {}]
  %s3 = inlined_call_operand.vmem [shape: f32[8,512], index: 3, kind: output, shape index: {}]
  %s4 = sld [smem:[#allocation0]]
  $region18: #{transam_forward.1} parent=0
    _
  %s6 = ssub.s32 1, %s4
  %s7 = scalar_select 0, %s6, %s4
  %s8 = sshll.u32 %s0, 4
  %s9 = int_to_ptr.vmem [resolvable:$true] %s8
  %11 = dma.vmem_to_smem %s9, 32, [#allocation3], [#allocation2]
  %12 = dma.done [#allocation2], 32
  %13 = sfence
  // Predicated region
  $region2: #{transam_forward.1} parent=0 // pred_check
    _
  $region3: #{transam_forward.1} parent=0 // pred_check_branch
    %15 = sbr.rel (0) target = $region5
  $region4: #{transam_forward.1} parent=0 // pred_region
    _
  $region5: #{transam_forward.1} parent=0 // pred_fallthru
    _
  // Predicated region
  $region6: #{transam_forward.1} parent=0 // pred_check
    _
  $region7: #{transam_forward.1} parent=0 // pred_check_branch
    %17 = sbr.rel (0) target = $region9
  $region8: #{transam_forward.1} parent=0 // pred_region
    _
  $region9: #{transam_forward.1} parent=0 // pred_fallthru
    _
  %s18 = sld [smem:[#allocation3 + $0x8b]]
  %v19 = vld [vmem:[%s1] sm:$0xf]
  %v20 = vstv %s18
  %v21 = vmul.f32 %v19, %v20
  %v22 = vld [vmem:[%s2] sm:$0xf]
  %v23 = vadd.f32 %v21, %v22
  %v25 = vlaneseq
  %v26 = vshrl.u32 %v25, 7
  %v27 = vsub.s32 0, %v26
  %v28 = vrot.slane %v23, %v27
  %v29 = vlaneseq
  %v30 = vshrl.u32 %v29, 7
  %v31 = vsub.s32 1, %v30
  %v32 = vrot.slane %v23, %v31
  %v33 = vlaneseq
  %v34 = vshrl.u32 %v33, 7
  %v35 = vsub.s32 2, %v34
  %v36 = vrot.slane %v23, %v35
  %v37 = vlaneseq
  %v38 = vshrl.u32 %v37, 7
  %v39 = vsub.s32 3, %v38
  %v40 = vrot.slane %v23, %v39
  %45 = vst [vmem:[%s3] sm:$0xff] %v28
  %46 = vst [vmem:[%s3 + $0x8] sm:$0xff] %v32
  %47 = vst [vmem:[%s3 + $0x10] sm:$0xff] %v36
  %48 = vst [vmem:[%s3 + $0x18] sm:$0xff] %v40
  // Predicated region
  $region10: #{transam_forward.1} parent=0 // pred_check
    _
  $region11: #{transam_forward.1} parent=0 // pred_check_branch
    %50 = sbr.rel (0) target = $region13
  $region12: #{transam_forward.1} parent=0 // pred_region
    _
  $region13: #{transam_forward.1} parent=0 // pred_fallthru
    _
  // Predicated region
  $region14: #{transam_forward.1} parent=0 // pred_check
    _
  $region15: #{transam_forward.1} parent=0 // pred_check_branch
    %52 = sbr.rel (0) target = $region17
  $region16: #{transam_forward.1} parent=0 // pred_region
    _
  $region17: #{transam_forward.1} parent=0 // pred_fallthru
    _

</llo_original>
